<compile_context>
chip_gen: v5e
topology: v5e:2x2
jax: 0.10.0
libtpu: 0.0.40
codegen_flags: <defaults>
</compile_context>

<pallas_src>
import math

import jax
import jax.numpy as jnp
from jax import lax
from jax.experimental import pallas as pl
from jax.experimental.pallas import tpu as pltpu


_SQRT_2_OVER_PI = math.sqrt(2.0 / math.pi)


def _gelu_tanh(x):
    # PyTorch gelu(approximate='tanh'):
    #   0.5 * x * (1 + tanh(sqrt(2/pi) * (x + 0.044715 * x^3)))
    # tanh lowers to the EUP slot and overlaps with MXU work.
    return 0.5 * x * (1.0 + jnp.tanh(_SQRT_2_OVER_PI * (x + 0.044715 * x * x * x)))


def _partial_down(x_ref, wgu_ref, wd_ref):
    """One (tm, ti) slice of the MLP: fused gate||up GEMM, gelu*up, down partial."""
    dn = (((1,), (0,)), ((), ()))                                # [M,K] @ [K,N]
    x = x_ref[...]                                               # (tm, H)     bf16
    gu = lax.dot_general(x, wgu_ref[...], dn,
                         preferred_element_type=jnp.float32)     # (tm, 2*ti)  f32
    ti = gu.shape[1] // 2                                        # static
    gate, up = gu[:, :ti], gu[:, ti:]
    h = _gelu_tanh(gate) * up                                    # (tm, ti)    f32
    return lax.dot_general(h.astype(wd_ref.dtype), wd_ref[...], dn,
                           preferred_element_type=jnp.float32)   # (tm, H)     f32


def _kernel_acc_out(x_ref, wgu_ref, wd_ref, o_ref):
    # f32 output: accumulate directly into the VMEM-resident output block.
    j = pl.program_id(1)

    @pl.when(j == 0)
    def _():
        o_ref[...] = jnp.zeros_like(o_ref)

    o_ref[...] += _partial_down(x_ref, wgu_ref, wd_ref)


def _kernel_acc_scratch(x_ref, wgu_ref, wd_ref, o_ref, acc_ref):
    # non-f32 output: f32 scratch accumulator, cast on the last reduction step.
    j = pl.program_id(1)

    @pl.when(j == 0)
    def _():
        acc_ref[...] = jnp.zeros_like(acc_ref)

    acc_ref[...] += _partial_down(x_ref, wgu_ref, wd_ref)

    @pl.when(j == pl.num_programs(1) - 1)
    def _():
        o_ref[...] = acc_ref[...].astype(o_ref.dtype)


def _vmem_capacity_bytes():
    try:
        info = pltpu.get_tpu_info()
        cap = getattr(info, "vmem_capacity_bytes", None)
        if cap:
            return int(cap)
    except Exception:
        pass
    return 64 << 20  # conservative default (v7x per-core VMEM)


def _vmem_needed(tm, ti, H, x_bytes, out_bytes, acc_in_out):
    wb = 2  # bf16 weights
    need = 2 * tm * H * x_bytes            # x tile, double-buffered
    need += 2 * (2 * ti) * H * wb          # fused gate||up weight tile, db
    need += 2 * ti * H * wb                # down weight tile, db
    need += 2 * tm * H * out_bytes         # output tile, db
    if not acc_in_out:
        need += tm * H * 4                 # f32 accumulator scratch
    need += 16 * tm * ti                   # implicit f32 gu / gelu / h intermediates
    return need


def _divisible(dim, cands):
    opts = [c for c in cands if c <= dim and dim % c == 0]
    return sorted(opts, reverse=True) if opts else [dim]


def _choose_tiles(M, I, H, x_bytes, out_bytes, acc_in_out, vmem_cap):
    small_vmem = vmem_cap <= (72 << 20)          # v7x-class (64 MiB/core)
    if small_vmem:
        tm_cands = (768, 640, 512, 384, 256, 128, 64, 32, 16, 8)
        ti_cands = (512, 256, 128)               # budget pushes this to 256
        budget = int(0.72 * vmem_cap)
    else:                                        # v5e / v6e (128 MiB)
        tm_cands = (1024, 768, 512, 256, 128, 64, 32, 16, 8)
        ti_cands = (1024, 512, 256, 128)         # 384 dropped: not MXU-256 aligned
        budget = int(0.80 * vmem_cap)

    tm_opts = _divisible(M, tm_cands)
    ti_opts = _divisible(I, ti_cands)

    def fits(tm, ti):
        return _vmem_needed(tm, ti, H, x_bytes, out_bytes, acc_in_out) <= budget

    # Largest tm first (weight-streaming roofline), then grow ti under budget.
    ti_min = ti_opts[-1]
    tm = next((c for c in tm_opts if fits(c, ti_min)), tm_opts[-1])
    ti = next((c for c in ti_opts if fits(tm, c)), ti_min)
    return tm, ti


def gemma_mlp(x, w_gate, w_up, w_down, *, tm=None, ti=None,
              compute_dtype=jnp.bfloat16):
    """GemmaMLP forward.

    x       : (B, S, H)
    w_gate  : (I, H)   PyTorch nn.Linear layout (out_features, in_features)
    w_up    : (I, H)
    w_down  : (H, I)
    """
    B, S, H = x.shape
    I, Hg = w_gate.shape
    assert Hg == H and w_up.shape == (I, H) and w_down.shape == (H, I)
    M = B * S

    out_dtype = x.dtype
    acc_in_out = (jnp.dtype(out_dtype) == jnp.dtype(jnp.float32))
    x_bytes = jnp.dtype(compute_dtype).itemsize
    out_bytes = jnp.dtype(out_dtype).itemsize

    vmem_cap = _vmem_capacity_bytes()
    auto_tm, auto_ti = _choose_tiles(M, I, H, x_bytes, out_bytes, acc_in_out, vmem_cap)
    if tm is None:
        tm = auto_tm
    if ti is None:
        ti = auto_ti

    assert M % tm == 0 and I % ti == 0, "tile sizes must divide M and I"
    assert tm == M or tm % 8 == 0, "row tile must be a multiple of 8 (sublane)"
    assert ti == I or ti % 128 == 0, "intermediate tile must be a multiple of 128 (lane)"

    # --- Weight preprocessing: bf16 cast fused with the [K,N] transpose and
    # the per-tile gate||up interleave (single XLA fusion pass over each weight).
    n_ti = I // ti
    wgu = jnp.stack(
        [w_gate.astype(compute_dtype).T.reshape(H, n_ti, ti),
         w_up.astype(compute_dtype).T.reshape(H, n_ti, ti)],
        axis=2,
    ).reshape(H, 2 * I)                                   # block j = [gate_j | up_j]
    wd = w_down.astype(compute_dtype).T                   # (I, H)
    x2 = x.reshape(M, H).astype(compute_dtype)

    vmem_needed = _vmem_needed(tm, ti, H, x_bytes, out_bytes, acc_in_out)
    vmem_limit = int(min(max(vmem_needed + (8 << 20), 32 << 20),
                         int(0.9 * vmem_cap)))

    cost = pl.CostEstimate(
        flops=6 * M * H * I,
        transcendentals=M * I,
        bytes_accessed=((M // tm) * 3 * H * I * x_bytes      # weights re-streamed
                        + M * H * (x_bytes + out_bytes)),
    )

    in_specs = [
        pl.BlockSpec((tm, H), lambda i, j: (i, 0)),          # x row tile
        pl.BlockSpec((H, 2 * ti), lambda i, j: (0, j)),      # fused gate||up [K,N]
        pl.BlockSpec((ti, H), lambda i, j: (j, 0)),          # down weight   [K,N]
    ]
    out_spec = pl.BlockSpec((tm, H), lambda i, j: (i, 0))

    if acc_in_out:
        kernel = _kernel_acc_out
        scratch_shapes = []
    else:
        kernel = _kernel_acc_scratch
        scratch_shapes = [pltpu.VMEM((tm, H), jnp.float32)]

    out = pl.pallas_call(
        kernel,
        out_shape=jax.ShapeDtypeStruct((M, H), out_dtype),
        grid_spec=pltpu.PrefetchScalarGridSpec(
            num_scalar_prefetch=0,
            grid=(M // tm, I // ti),
            in_specs=in_specs,
            out_specs=out_spec,
            scratch_shapes=scratch_shapes,
        ),
        compiler_params=pltpu.CompilerParams(
            dimension_semantics=("parallel", "arbitrary"),
            vmem_limit_bytes=vmem_limit),
        cost_estimate=cost,
    )(x2, wgu, wd)

    return out.reshape(B, S, H)


def _reference(x, w_gate, w_up, w_down):
    gate = jnp.einsum("bsh,ih->bsi", x, w_gate)
    up = jnp.einsum("bsh,ih->bsi", x, w_up)
    h = _gelu_tanh(gate) * up
    return jnp.einsum("bsi,hi->bsh", h, w_down)


if __name__ == "__main__":
    # Small GemmaMLP config: hidden_size=128, intermediate_size=256
    B, S, H, I = 2, 16, 128, 256

    key = jax.random.PRNGKey(0)
    kx, kg, ku, kd = jax.random.split(key, 4)

    x = jax.random.normal(kx, (B, S, H), dtype=jnp.float32)
    # PyTorch nn.Linear weight shape = (out_features, in_features).
    w_gate = jax.random.normal(kg, (I, H), dtype=jnp.float32) * 0.02
    w_up = jax.random.normal(ku, (I, H), dtype=jnp.float32) * 0.02
    w_down = jax.random.normal(kd, (H, I), dtype=jnp.float32) * 0.02

    ref = _reference(x, w_gate, w_up, w_down)

    # 1) Auto tile selection (single grid step at these small shapes).
    out = jax.block_until_ready(gemma_mlp(x, w_gate, w_up, w_down))
    assert out.shape == (B, S, H)
    assert jnp.allclose(out, ref, atol=5e-3, rtol=5e-2), "auto-tile mismatch"

    # 2) Forced small tiles -> multi-step grid on BOTH axes, exercising the
    #    reduction accumulation and @pl.when init/finalize paths.
    out2 = jax.block_until_ready(gemma_mlp(x, w_gate, w_up, w_down, tm=16, ti=128))
    assert jnp.allclose(out2, ref, atol=5e-3, rtol=5e-2), "tiled mismatch"

    # 3) bf16 activations -> scratch-accumulator kernel variant.
    xb = x.astype(jnp.bfloat16)
    outb = jax.block_until_ready(gemma_mlp(xb, w_gate, w_up, w_down, tm=16, ti=128))
    refb = _reference(xb.astype(jnp.float32), w_gate, w_up, w_down)
    assert jnp.allclose(outb.astype(jnp.float32), refb, atol=3e-2, rtol=1e-1), \
        "bf16 mismatch"

    print("KERNEL_OK")
</pallas_src>

<mosaic_0001>
module attributes {stable_mosaic.version = 11 : i64} {
  func.func @_kernel_acc_out(%arg0: i32, %arg1: i32, %arg2: memref<32x128xbf16, #tpu.memory_space<vmem>>, %arg3: memref<128x512xbf16, #tpu.memory_space<vmem>>, %arg4: memref<256x128xbf16, #tpu.memory_space<vmem>>, %arg5: memref<32x128xf32, #tpu.memory_space<vmem>>) attributes {dimension_semantics = [#tpu.dimension_semantics<parallel>, #tpu.dimension_semantics<arbitrary>], iteration_bounds = array<i64: 1, 1>, scalar_prefetch = 0 : i64, scratch_operands = 0 : i64, tpu.core_type = #tpu.core_type<tc>, window_params = [{transform_indices = @transform_0, window_bounds = array<i64: 32, 128>}, {transform_indices = @transform_1, window_bounds = array<i64: 128, 512>}, {transform_indices = @transform_2, window_bounds = array<i64: 256, 128>}, {transform_indices = @transform_3, window_bounds = array<i64: 32, 128>}]} {
    %c0_i32 = arith.constant 0 : i32
    %0 = arith.cmpi eq, %arg1, %c0_i32 : i32
    %1 = arith.extui %0 : i1 to i32
    %c0_i32_0 = arith.constant 0 : i32
    %2 = arith.cmpi ne, %1, %c0_i32_0 : i32
    scf.if %2 {
      %cst_15 = arith.constant 0.000000e+00 : f32
      %28 = vector.broadcast %cst_15 : f32 to vector<32x128xf32>
      %c0_16 = arith.constant 0 : index
      %c0_17 = arith.constant 0 : index
      %29 = vector.load %arg5[%c0_16, %c0_17] : memref<32x128xf32, #tpu.memory_space<vmem>>, vector<32x128xf32>
      tpu.vector_store %arg5[%c0_16, %c0_17], %28 {strides = array<i32>} : memref<32x128xf32, #tpu.memory_space<vmem>>, vector<32x128xf32>,
    } else {
    }
    %c0 = arith.constant 0 : index
    %c0_1 = arith.constant 0 : index
    %3 = vector.load %arg5[%c0, %c0_1] : memref<32x128xf32, #tpu.memory_space<vmem>>, vector<32x128xf32>
    %c0_2 = arith.constant 0 : index
    %c0_3 = arith.constant 0 : index
    %4 = vector.load %arg2[%c0_2, %c0_3] : memref<32x128xbf16, #tpu.memory_space<vmem>>, vector<32x128xbf16>
    %c0_4 = arith.constant 0 : index
    %c0_5 = arith.constant 0 : index
    %5 = vector.load %arg3[%c0_4, %c0_5] : memref<128x512xbf16, #tpu.memory_space<vmem>>, vector<128x512xbf16>
    %cst = arith.constant dense<0.000000e+00> : vector<32x512xf32>
    %6 = tpu.matmul %4, %5, %cst {dimension_numbers = #tpu.dot_dimension_numbers<[1], [0], [0], [1], [0, 0, 1, 1], [], []>} : vector<32x128xbf16>, vector<128x512xbf16>, vector<32x512xf32> -> vector<32x512xf32>
    %7 = vector.extract_strided_slice %6 {offsets = [0, 0], sizes = [32, 256], strides = [1, 1]} : vector<32x512xf32> to vector<32x256xf32>
    %8 = vector.extract_strided_slice %6 {offsets = [0, 256], sizes = [32, 256], strides = [1, 1]} : vector<32x512xf32> to vector<32x256xf32>
    %cst_6 = arith.constant 5.000000e-01 : f32
    %9 = vector.broadcast %cst_6 : f32 to vector<32x256xf32>
    %10 = arith.mulf %9, %7 : vector<32x256xf32>
    %cst_7 = arith.constant 4.471500e-02 : f32
    %11 = vector.broadcast %cst_7 : f32 to vector<32x256xf32>
    %12 = arith.mulf %11, %7 : vector<32x256xf32>
    %13 = arith.mulf %12, %7 : vector<32x256xf32>
    %14 = arith.mulf %13, %7 : vector<32x256xf32>
    %15 = arith.addf %7, %14 : vector<32x256xf32>
    %cst_8 = arith.constant 0.797884583 : f32
    %16 = vector.broadcast %cst_8 : f32 to vector<32x256xf32>
    %17 = arith.mulf %16, %15 : vector<32x256xf32>
    %18 = math.tanh %17 : vector<32x256xf32>
    %cst_9 = arith.constant 1.000000e+00 : f32
    %19 = vector.broadcast %cst_9 : f32 to vector<32x256xf32>
    %20 = arith.addf %19, %18 : vector<32x256xf32>
    %21 = arith.mulf %10, %20 : vector<32x256xf32>
    %22 = arith.mulf %21, %8 : vector<32x256xf32>
    %23 = arith.truncf %22 : vector<32x256xf32> to vector<32x256xbf16>
    %c0_10 = arith.constant 0 : index
    %c0_11 = arith.constant 0 : index
    %24 = vector.load %arg4[%c0_10, %c0_11] : memref<256x128xbf16, #tpu.memory_space<vmem>>, vector<256x128xbf16>
    %cst_12 = arith.constant dense<0.000000e+00> : vector<32x128xf32>
    %25 = tpu.matmul %23, %24, %cst_12 {dimension_numbers = #tpu.dot_dimension_numbers<[1], [0], [0], [1], [0, 0, 1, 1], [], []>} : vector<32x256xbf16>, vector<256x128xbf16>, vector<32x128xf32> -> vector<32x128xf32>
    %26 = arith.addf %3, %25 : vector<32x128xf32>
    %c0_13 = arith.constant 0 : index
    %c0_14 = arith.constant 0 : index
    %27 = vector.load %arg5[%c0_13, %c0_14] : memref<32x128xf32, #tpu.memory_space<vmem>>, vector<32x128xf32>
    tpu.vector_store %arg5[%c0_13, %c0_14], %26 {strides = array<i32>} : memref<32x128xf32, #tpu.memory_space<vmem>>, vector<32x128xf32>,
    return
  }
  func.func @transform_0(%arg0: i32, %arg1: i32) -> (i32, i32) {
    %c0_i32 = arith.constant 0 : i32
    %c0_i32_0 = arith.constant 0 : i32
    return %arg0, %c0_i32 : i32, i32
  }
  func.func @transform_1(%arg0: i32, %arg1: i32) -> (i32, i32) {
    %c0_i32 = arith.constant 0 : i32
    %c0_i32_0 = arith.constant 0 : i32
    return %c0_i32, %arg1 : i32, i32
  }
  func.func @transform_2(%arg0: i32, %arg1: i32) -> (i32, i32) {
    %c0_i32 = arith.constant 0 : i32
    %c0_i32_0 = arith.constant 0 : i32
    return %arg1, %c0_i32 : i32, i32
  }
  func.func @transform_3(%arg0: i32, %arg1: i32) -> (i32, i32) {
    %c0_i32 = arith.constant 0 : i32
    %c0_i32_0 = arith.constant 0 : i32
    return %arg0, %c0_i32 : i32, i32
  }
}

</mosaic_0001>

<llo_original>
// kernel: tpu_custom_call.1
$region0: #{tpu_custom_call.1}
  #allocation0 [shape = 'u32[]', space=smem, size = 0x4, offset = 0x4, fixed_abs, tag = 'smem constant byte address 0x4 - core index']
  #allocation1 [shape = 'u32[72,128]{1,0:T(1,128)}', space=vmem, size = 0x9000, scoped, tag = 'internal scratch']
  %s0 = inlined_call_operand.hbm [shape: bf16[32,128], index: 0, kind: input, shape index: {}]
  %s1 = inlined_call_operand.hbm [shape: bf16[128,512], index: 1, kind: input, shape index: {}]
  %s2 = inlined_call_operand.hbm [shape: bf16[256,128], index: 2, kind: input, shape index: {}]
  %s3 = inlined_call_operand.hbm [shape: f32[32,128], index: 3, kind: output, shape index: {}]
  %s4 = sld [smem:[#allocation0]]
  $region38: #{tpu_custom_call.1} parent=0
    _
  %s6 = ssub.s32 1, %s4
  %s7 = scalar_select 0, %s6, %s4
  $region1: #{tpu_custom_call.1} parent=0
    #allocation2 [shape = 'u8[8192]{0}', space=vmem, size = 0x2000, scoped, tag = 'input window, operand 0, single buffered']
    #allocation3 [shape = 's32[1]{0}', space=sflag, size = 0x4, scoped, tag = 'scoped memory for tpu_custom_call.1']
    #allocation4 [shape = 's32[1]{0}', space=sflag, size = 0x4, scoped, tag = 'scoped memory for tpu_custom_call.1']
    #allocation5 [shape = 'u8[131072]{0}', space=vmem, size = 0x20000, scoped, tag = 'input window, operand 1, single buffered']
    #allocation6 [shape = 's32[1]{0}', space=sflag, size = 0x4, scoped, tag = 'scoped memory for tpu_custom_call.1']
    #allocation7 [shape = 'u8[65536]{0}', space=vmem, size = 0x10000, scoped, tag = 'input window, operand 2, single buffered']
    #allocation8 [shape = 'u8[16384]{0}', space=vmem, size = 0x4000, scoped, tag = 'output window, operand 0, single buffered']
    %8 = vsyncpa [#allocation3], 0
    %9 = vsyncpa [#allocation6], 0
    %10 = vsyncpa [#allocation4], 0
    // Predicated region
    $region2: #{tpu_custom_call.1} parent=1 // pred_check
      _
    $region3: #{tpu_custom_call.1} parent=1 // pred_check_branch
      %12 = sbr.rel (0) target = $region5
    $region4: #{tpu_custom_call.1} parent=1 // pred_region
      %14 = vsyncadd [#allocation3], 0
      %s15 = sshll.u32 %s0, 4
      %s16 = int_to_ptr.hbm [resolvable:$true] %s15
      %s17 = sshll.u32 [#allocation2], 4
      %s18 = int_to_ptr.vmem [resolvable:$true] %s17
      %23 = dma.hbm_to_vmem [thread:$0]  %s16, 256, %s18, [#allocation3], 64, 64, 4
    $region5: #{tpu_custom_call.1} parent=1 // pred_fallthru
      _
    // Predicated region
    $region6: #{tpu_custom_call.1} parent=1 // pred_check
      _
    $region7: #{tpu_custom_call.1} parent=1 // pred_check_branch
      %25 = sbr.rel (0) target = $region9
    $region8: #{tpu_custom_call.1} parent=1 // pred_region
      %27 = vsyncadd [#allocation6], 0
      %s28 = sshll.u32 %s1, 4
      %s29 = int_to_ptr.hbm [resolvable:$true] %s28
      %s30 = sshll.u32 [#allocation5], 4
      %s31 = int_to_ptr.vmem [resolvable:$true] %s30
      %36 = dma.hbm_to_vmem [thread:$0]  %s29, 4096, %s31, [#allocation6], 256, 256, 16
    $region9: #{tpu_custom_call.1} parent=1 // pred_fallthru
      _
    // Predicated region
    $region10: #{tpu_custom_call.1} parent=1 // pred_check
      _
    $region11: #{tpu_custom_call.1} parent=1 // pred_check_branch
      %38 = sbr.rel (0) target = $region13
    $region12: #{tpu_custom_call.1} parent=1 // pred_region
      %40 = vsyncadd [#allocation6], 0
      %s41 = sshll.u32 %s2, 4
      %s42 = int_to_ptr.hbm [resolvable:$true] %s41
      %s43 = sshll.u32 [#allocation7], 4
      %s44 = int_to_ptr.vmem [resolvable:$true] %s43
      %49 = dma.hbm_to_vmem [thread:$0]  %s42, 2048, %s44, [#allocation6], 64, 64, 4
    $region13: #{tpu_custom_call.1} parent=1 // pred_fallthru
      _
    // Predicated region
    $region14: #{tpu_custom_call.1} parent=1 // pred_check
      _
    $region15: #{tpu_custom_call.1} parent=1 // pred_check_branch
      %51 = sbr.rel (0) target = $region17
    $region16: #{tpu_custom_call.1} parent=1 // pred_region
      %53 = dma.done [#allocation3], 256
    $region17: #{tpu_custom_call.1} parent=1 // pred_fallthru
      _
    // Predicated region
    $region18: #{tpu_custom_call.1} parent=1 // pred_check
      _
    $region19: #{tpu_custom_call.1} parent=1 // pred_check_branch
      %55 = sbr.rel (0) target = $region21
    $region20: #{tpu_custom_call.1} parent=1 // pred_region
      %57 = dma.done [#allocation6], 4096
    $region21: #{tpu_custom_call.1} parent=1 // pred_fallthru
      _
    // Predicated region
    $region22: #{tpu_custom_call.1} parent=1 // pred_check
      _
    $region23: #{tpu_custom_call.1} parent=1 // pred_check_branch
      %59 = sbr.rel (0) target = $region25
    $region24: #{tpu_custom_call.1} parent=1 // pred_region
      %61 = dma.done [#allocation6], 2048
    $region25: #{tpu_custom_call.1} parent=1 // pred_fallthru
      _
    %p62 = scmp.eq.s32.totalorder 0, 0
    // Predicated region
    $region26: #{tpu_custom_call.1} parent=1 // pred_check
      %p63 = pneg %p62
    $region27: #{tpu_custom_call.1} parent=1 // pred_check_branch
      %65 = sbr.rel (%p63) target = $region29
    $region28: #{tpu_custom_call.1} parent=1 // pred_region
      %66 = vst [vmem:[#allocation8] sm:$0xff] 0.0
      %67 = vst [vmem:[#allocation8 + $0x8] sm:$0xff] 0.0
      %68 = vst [vmem:[#allocation8 + $0x10] sm:$0xff] 0.0
      %69 = vst [vmem:[#allocation8 + $0x18] sm:$0xff] 0.0
    $region29: #{tpu_custom_call.1} parent=1 // pred_fallthru
      _
    %v70 = vld [vmem:[#allocation8] sm:$0xff]
    %v71 = vld [vmem:[#allocation8 + $0x8] sm:$0xff]
    %v72 = vld [vmem:[#allocation8 + $0x10] sm:$0xff]
    %v73 = vld [vmem:[#allocation8 + $0x18] sm:$0xff]
    %v74 = vld [vmem:[#allocation2] sm:$0xf]
    %v75 = vld [vmem:[#allocation2 + $0x4] sm:$0xf]
    %v76 = vld [vmem:[#allocation2 + $0x8] sm:$0xf]
    %v77 = vld [vmem:[#allocation2 + $0xc] sm:$0xf]
    %v78 = vld [vmem:[#allocation5] sm:$0xff]
    %v79 = vld [vmem:[#allocation5 + $0x8] sm:$0xff]
    %v80 = vld [vmem:[#allocation5 + $0x10] sm:$0xff]
    %v81 = vld [vmem:[#allocation5 + $0x18] sm:$0xff]
    %v82 = vld [vmem:[#allocation5 + $0x20] sm:$0xff]
    %v83 = vld [vmem:[#allocation5 + $0x28] sm:$0xff]
    %v84 = vld [vmem:[#allocation5 + $0x30] sm:$0xff]
    %v85 = vld [vmem:[#allocation5 + $0x38] sm:$0xff]
    %v86 = vld [vmem:[#allocation5 + $0x40] sm:$0xff]
    %v87 = vld [vmem:[#allocation5 + $0x48] sm:$0xff]
    %v88 = vld [vmem:[#allocation5 + $0x50] sm:$0xff]
    %v89 = vld [vmem:[#allocation5 + $0x58] sm:$0xff]
    %v90 = vld [vmem:[#allocation5 + $0x60] sm:$0xff]
    %v91 = vld [vmem:[#allocation5 + $0x68] sm:$0xff]
    %v92 = vld [vmem:[#allocation5 + $0x70] sm:$0xff]
    %v93 = vld [vmem:[#allocation5 + $0x78] sm:$0xff]
    %v94 = vld [vmem:[#allocation5 + $0x80] sm:$0xff]
    %v95 = vld [vmem:[#allocation5 + $0x88] sm:$0xff]
    %v96 = vld [vmem:[#allocation5 + $0x90] sm:$0xff]
    %v97 = vld [vmem:[#allocation5 + $0x98] sm:$0xff]
    %v98 = vld [vmem:[#allocation5 + $0xa0] sm:$0xff]
    %v99 = vld [vmem:[#allocation5 + $0xa8] sm:$0xff]
    %v100 = vld [vmem:[#allocation5 + $0xb0] sm:$0xff]
    %v101 = vld [vmem:[#allocation5 + $0xb8] sm:$0xff]
    %v102 = vld [vmem:[#allocation5 + $0xc0] sm:$0xff]
    %v103 = vld [vmem:[#allocation5 + $0xc8] sm:$0xff]
    %v104 = vld [vmem:[#allocation5 + $0xd0] sm:$0xff]
    %v105 = vld [vmem:[#allocation5 + $0xd8] sm:$0xff]
    %v106 = vld [vmem:[#allocation5 + $0xe0] sm:$0xff]
    %v107 = vld [vmem:[#allocation5 + $0xe8] sm:$0xff]
    %v108 = vld [vmem:[#allocation5 + $0xf0] sm:$0xff]
    %v109 = vld [vmem:[#allocation5 + $0xf8] sm:$0xff]
    %v114 = vunpack.c.l.b16 %v74
    %v115 = vunpack.c.l.b16 %v75
    %v116 = vunpack.c.l.b16 %v76
    %v117 = vunpack.c.l.b16 %v77
    %v118 = vpack.c.b16 %v115, %v114
    %v119 = vpack.c.b16 %v117, %v116
    %v154 = vunpack.c.l.b16 %v78
    %v155 = vunpack.c.h.b16 %v78
    %v156 = vunpack.c.l.b16 %v79
    %v157 = vunpack.c.h.b16 %v79
    %v158 = vunpack.c.l.b16 %v80
    %v159 = vunpack.c.h.b16 %v80
    %v160 = vunpack.c.l.b16 %v81
    %v161 = vunpack.c.h.b16 %v81
    %v162 = vunpack.c.l.b16 %v82
    %v163 = vunpack.c.h.b16 %v82
    %v164 = vunpack.c.l.b16 %v83
    %v165 = vunpack.c.h.b16 %v83
    %v166 = vunpack.c.l.b16 %v84
    %v167 = vunpack.c.h.b16 %v84
    %v168 = vunpack.c.l.b16 %v85
    %v169 = vunpack.c.h.b16 %v85
    %v170 = vunpack.c.l.b16 %v86
    %v171 = vunpack.c.h.b16 %v86
    %v172 = vunpack.c.l.b16 %v87
    %v173 = vunpack.c.h.b16 %v87
    %v174 = vunpack.c.l.b16 %v88
    %v175 = vunpack.c.h.b16 %v88
    %v176 = vunpack.c.l.b16 %v89
    %v177 = vunpack.c.h.b16 %v89
    %v178 = vunpack.c.l.b16 %v90
    %v179 = vunpack.c.h.b16 %v90
    %v180 = vunpack.c.l.b16 %v91
    %v181 = vunpack.c.h.b16 %v91
    %v182 = vunpack.c.l.b16 %v92
    %v183 = vunpack.c.h.b16 %v92
    %v184 = vunpack.c.l.b16 %v93
    %v185 = vunpack.c.h.b16 %v93
    %v186 = vunpack.c.l.b16 %v94
    %v187 = vunpack.c.h.b16 %v94
    %v188 = vunpack.c.l.b16 %v95
    %v189 = vunpack.c.h.b16 %v95
    %v190 = vunpack.c.l.b16 %v96
    %v191 = vunpack.c.h.b16 %v96
    %v192 = vunpack.c.l.b16 %v97
    %v193 = vunpack.c.h.b16 %v97
    %v194 = vunpack.c.l.b16 %v98
    %v195 = vunpack.c.h.b16 %v98
    %v196 = vunpack.c.l.b16 %v99
    %v197 = vunpack.c.h.b16 %v99
    %v198 = vunpack.c.l.b16 %v100
    %v199 = vunpack.c.h.b16 %v100
    %v200 = vunpack.c.l.b16 %v101
    %v201 = vunpack.c.h.b16 %v101
    %v202 = vunpack.c.l.b16 %v102
    %v203 = vunpack.c.h.b16 %v102
    %v204 = vunpack.c.l.b16 %v103
    %v205 = vunpack.c.h.b16 %v103
    %v206 = vunpack.c.l.b16 %v104
    %v207 = vunpack.c.h.b16 %v104
    %v208 = vunpack.c.l.b16 %v105
    %v209 = vunpack.c.h.b16 %v105
    %v210 = vunpack.c.l.b16 %v106
    %v211 = vunpack.c.h.b16 %v106
    %v212 = vunpack.c.l.b16 %v107
    %v213 = vunpack.c.h.b16 %v107
    %v214 = vunpack.c.l.b16 %v108
    %v215 = vunpack.c.h.b16 %v108
    %v216 = vunpack.c.l.b16 %v109
    %v217 = vunpack.c.h.b16 %v109
    %v218 = vpack.c.b16 %v158, %v154
    %v219 = vpack.c.b16 %v159, %v155
    %v220 = vpack.c.b16 %v160, %v156
    %v221 = vpack.c.b16 %v161, %v157
    %v222 = vpack.c.b16 %v166, %v162
    %v223 = vpack.c.b16 %v167, %v163
    %v224 = vpack.c.b16 %v168, %v164
    %v225 = vpack.c.b16 %v169, %v165
    %v226 = vpack.c.b16 %v174, %v170
    %v227 = vpack.c.b16 %v175, %v171
    %v228 = vpack.c.b16 %v176, %v172
    %v229 = vpack.c.b16 %v177, %v173
    %v230 = vpack.c.b16 %v182, %v178
    %v231 = vpack.c.b16 %v183, %v179
    %v232 = vpack.c.b16 %v184, %v180
    %v233 = vpack.c.b16 %v185, %v181
    %v234 = vpack.c.b16 %v190, %v186
    %v235 = vpack.c.b16 %v191, %v187
    %v236 = vpack.c.b16 %v192, %v188
    %v237 = vpack.c.b16 %v193, %v189
    %v238 = vpack.c.b16 %v198, %v194
    %v239 = vpack.c.b16 %v199, %v195
    %v240 = vpack.c.b16 %v200, %v196
    %v241 = vpack.c.b16 %v201, %v197
    %v242 = vpack.c.b16 %v206, %v202
    %v243 = vpack.c.b16 %v207, %v203
    %v244 = vpack.c.b16 %v208, %v204
    %v245 = vpack.c.b16 %v209, %v205
    %v246 = vpack.c.b16 %v214, %v210
    %v247 = vpack.c.b16 %v215, %v211
    %v248 = vpack.c.b16 %v216, %v212
    %v249 = vpack.c.b16 %v217, %v213
    %282 = vmatpush.bf16.msra.mxu0 %v246
    %283 = vmatpush.bf16.msra.mxu0 %v242
    %284 = vmatpush.bf16.msra.mxu0 %v238
    %285 = vmatpush.bf16.msra.mxu0 %v234
    %286 = vmatpush.bf16.msra.mxu0 %v230
    %287 = vmatpush.bf16.msra.mxu0 %v226
    %288 = vmatpush.bf16.msra.mxu0 %v222
    %289 = vmatpush.bf16.msra.mxu0 %v218
    %290 = vmatmul.bf16.gmra.mxu0 %v118
    %v291 = vpop.f32.mrf.mxu0
    %v292 = vadd.f32 0.0, %v291
    %v293 = vpop.f32.mrf.mxu0
    %v294 = vadd.f32 0.0, %v293
    %295 = vmatmul.bf16.gmra.mxu0 %v119
    %v296 = vpop.f32.mrf.mxu0
    %v297 = vadd.f32 0.0, %v296
    %v298 = vpop.f32.mrf.mxu0
    %v299 = vadd.f32 0.0, %v298
    %300 = vdwg.mxu0
    %301 = vmatpush.bf16.msra.mxu0 %v247
    %302 = vmatpush.bf16.msra.mxu0 %v243
    %303 = vmatpush.bf16.msra.mxu0 %v239
    %304 = vmatpush.bf16.msra.mxu0 %v235
    %305 = vmatpush.bf16.msra.mxu0 %v231
    %306 = vmatpush.bf16.msra.mxu0 %v227
    %307 = vmatpush.bf16.msra.mxu0 %v223
    %308 = vmatpush.bf16.msra.mxu0 %v219
    %309 = vmatmul.bf16.gmra.mxu0 %v118
    %v310 = vpop.f32.mrf.mxu0
    %v311 = vadd.f32 0.0, %v310
    %v312 = vpop.f32.mrf.mxu0
    %v313 = vadd.f32 0.0, %v312
    %314 = vmatmul.bf16.gmra.mxu0 %v119
    %v315 = vpop.f32.mrf.mxu0
    %v316 = vadd.f32 0.0, %v315
    %v317 = vpop.f32.mrf.mxu0
    %v318 = vadd.f32 0.0, %v317
    %319 = vdwg.mxu0
    %320 = vmatpush.bf16.msra.mxu0 %v248
    %321 = vmatpush.bf16.msra.mxu0 %v244
    %322 = vmatpush.bf16.msra.mxu0 %v240
    %323 = vmatpush.bf16.msra.mxu0 %v236
    %324 = vmatpush.bf16.msra.mxu0 %v232
    %325 = vmatpush.bf16.msra.mxu0 %v228
    %326 = vmatpush.bf16.msra.mxu0 %v224
    %327 = vmatpush.bf16.msra.mxu0 %v220
    %328 = vmatmul.bf16.gmra.mxu0 %v118
    %v329 = vpop.f32.mrf.mxu0
    %v330 = vadd.f32 0.0, %v329
    %v331 = vpop.f32.mrf.mxu0
    %v332 = vadd.f32 0.0, %v331
    %333 = vmatmul.bf16.gmra.mxu0 %v119
    %v334 = vpop.f32.mrf.mxu0
    %v335 = vadd.f32 0.0, %v334
    %v336 = vpop.f32.mrf.mxu0
    %v337 = vadd.f32 0.0, %v336
    %338 = vdwg.mxu0
    %339 = vmatpush.bf16.msra.mxu0 %v249
    %340 = vmatpush.bf16.msra.mxu0 %v245
    %341 = vmatpush.bf16.msra.mxu0 %v241
    %342 = vmatpush.bf16.msra.mxu0 %v237
    %343 = vmatpush.bf16.msra.mxu0 %v233
    %344 = vmatpush.bf16.msra.mxu0 %v229
    %345 = vmatpush.bf16.msra.mxu0 %v225
    %346 = vmatpush.bf16.msra.mxu0 %v221
    %347 = vmatmul.bf16.gmra.mxu0 %v118
    %v348 = vpop.f32.mrf.mxu0
    %v349 = vadd.f32 0.0, %v348
    %v350 = vpop.f32.mrf.mxu0
    %v351 = vadd.f32 0.0, %v350
    %352 = vmatmul.bf16.gmra.mxu0 %v119
    %v353 = vpop.f32.mrf.mxu0
    %v354 = vadd.f32 0.0, %v353
    %v355 = vpop.f32.mrf.mxu0
    %v356 = vadd.f32 0.0, %v355
    %357 = vdwg.mxu0
    %v358 = vmul.f32 %v292, 0.5
    %v359 = vmul.f32 %v311, 0.5
    %v360 = vmul.f32 %v294, 0.5
    %v361 = vmul.f32 %v313, 0.5
    %v362 = vmul.f32 %v297, 0.5
    %v363 = vmul.f32 %v316, 0.5
    %v364 = vmul.f32 %v299, 0.5
    %v365 = vmul.f32 %v318, 0.5
    %v366 = vmul.f32 %v292, 0.044715
    %v367 = vmul.f32 %v311, 0.044715
    %v368 = vmul.f32 %v294, 0.044715
    %v369 = vmul.f32 %v313, 0.044715
    %v370 = vmul.f32 %v297, 0.044715
    %v371 = vmul.f32 %v316, 0.044715
    %v372 = vmul.f32 %v299, 0.044715
    %v373 = vmul.f32 %v318, 0.044715
    %v374 = vmul.f32 %v366, %v292
    %v375 = vmul.f32 %v367, %v311
    %v376 = vmul.f32 %v368, %v294
    %v377 = vmul.f32 %v369, %v313
    %v378 = vmul.f32 %v370, %v297
    %v379 = vmul.f32 %v371, %v316
    %v380 = vmul.f32 %v372, %v299
    %v381 = vmul.f32 %v373, %v318
    %v382 = vmul.f32 %v374, %v292
    %v383 = vmul.f32 %v375, %v311
    %v384 = vmul.f32 %v376, %v294
    %v385 = vmul.f32 %v377, %v313
    %v386 = vmul.f32 %v378, %v297
    %v387 = vmul.f32 %v379, %v316
    %v388 = vmul.f32 %v380, %v299
    %v389 = vmul.f32 %v381, %v318
    %v390 = vadd.f32 %v292, %v382
    %v391 = vadd.f32 %v311, %v383
    %v392 = vadd.f32 %v294, %v384
    %v393 = vadd.f32 %v313, %v385
    %v394 = vadd.f32 %v297, %v386
    %v395 = vadd.f32 %v316, %v387
    %v396 = vadd.f32 %v299, %v388
    %v397 = vadd.f32 %v318, %v389
    %v398 = vmul.f32 %v390, 0.7978846
    %v399 = vmul.f32 %v391, 0.7978846
    %v400 = vmul.f32 %v392, 0.7978846
    %v401 = vmul.f32 %v393, 0.7978846
    %v402 = vmul.f32 %v394, 0.7978846
    %v403 = vmul.f32 %v395, 0.7978846
    %v404 = vmul.f32 %v396, 0.7978846
    %v405 = vmul.f32 %v397, 0.7978846
    %v406 = vtanh.pop %v398
    %v407 = vtanh.pop %v399
    %v408 = vtanh.pop %v400
    %v409 = vtanh.pop %v401
    %v410 = vtanh.pop %v402
    %v411 = vtanh.pop %v403
    %v412 = vtanh.pop %v404
    %v413 = vtanh.pop %v405
    %v414 = vadd.f32 %v406, 1.0
    %v415 = vadd.f32 %v407, 1.0
    %v416 = vadd.f32 %v408, 1.0
    %v417 = vadd.f32 %v409, 1.0
    %v418 = vadd.f32 %v410, 1.0
    %v419 = vadd.f32 %v411, 1.0
    %v420 = vadd.f32 %v412, 1.0
    %v421 = vadd.f32 %v413, 1.0
    %v422 = vmul.f32 %v358, %v414
    %v423 = vmul.f32 %v359, %v415
    %v424 = vmul.f32 %v360, %v416
    %v425 = vmul.f32 %v361, %v417
    %v426 = vmul.f32 %v362, %v418
    %v427 = vmul.f32 %v363, %v419
    %v428 = vmul.f32 %v364, %v420
    %v429 = vmul.f32 %v365, %v421
    %v430 = vmul.f32 %v422, %v330
    %v431 = vmul.f32 %v423, %v349
    %v432 = vmul.f32 %v424, %v332
    %v433 = vmul.f32 %v425, %v351
    %v434 = vmul.f32 %v426, %v335
    %v435 = vmul.f32 %v427, %v354
    %v436 = vmul.f32 %v428, %v337
    %v437 = vmul.f32 %v429, %v356
    %v438 = vpack.c.bf16 %v432, %v430
    %v439 = vpack.c.bf16 %v433, %v431
    %v440 = vpack.c.bf16 %v436, %v434
    %v441 = vpack.c.bf16 %v437, %v435
    %v442 = vld [vmem:[#allocation7] sm:$0xf]
    %v443 = vld [vmem:[#allocation7 + $0x4] sm:$0xf]
    %v444 = vld [vmem:[#allocation7 + $0x8] sm:$0xf]
    %v445 = vld [vmem:[#allocation7 + $0xc] sm:$0xf]
    %v446 = vld [vmem:[#allocation7 + $0x10] sm:$0xf]
    %v447 = vld [vmem:[#allocation7 + $0x14] sm:$0xf]
    %v448 = vld [vmem:[#allocation7 + $0x18] sm:$0xf]
    %v449 = vld [vmem:[#allocation7 + $0x1c] sm:$0xf]
    %v450 = vld [vmem:[#allocation7 + $0x20] sm:$0xf]
    %v451 = vld [vmem:[#allocation7 + $0x24] sm:$0xf]
    %v452 = vld [vmem:[#allocation7 + $0x28] sm:$0xf]
    %v453 = vld [vmem:[#allocation7 + $0x2c] sm:$0xf]
    %v454 = vld [vmem:[#allocation7 + $0x30] sm:$0xf]
    %v455 = vld [vmem:[#allocation7 + $0x34] sm:$0xf]
    %v456 = vld [vmem:[#allocation7 + $0x38] sm:$0xf]
    %v457 = vld [vmem:[#allocation7 + $0x3c] sm:$0xf]
    %v458 = vld [vmem:[#allocation7 + $0x40] sm:$0xf]
    %v459 = vld [vmem:[#allocation7 + $0x44] sm:$0xf]
    %v460 = vld [vmem:[#allocation7 + $0x48] sm:$0xf]
    %v461 = vld [vmem:[#allocation7 + $0x4c] sm:$0xf]
    %v462 = vld [vmem:[#allocation7 + $0x50] sm:$0xf]
    %v463 = vld [vmem:[#allocation7 + $0x54] sm:$0xf]
    %v464 = vld [vmem:[#allocation7 + $0x58] sm:$0xf]
    %v465 = vld [vmem:[#allocation7 + $0x5c] sm:$0xf]
    %v466 = vld [vmem:[#allocation7 + $0x60] sm:$0xf]
    %v467 = vld [vmem:[#allocation7 + $0x64] sm:$0xf]
    %v468 = vld [vmem:[#allocation7 + $0x68] sm:$0xf]
    %v469 = vld [vmem:[#allocation7 + $0x6c] sm:$0xf]
    %v470 = vld [vmem:[#allocation7 + $0x70] sm:$0xf]
    %v471 = vld [vmem:[#allocation7 + $0x74] sm:$0xf]
    %v472 = vld [vmem:[#allocation7 + $0x78] sm:$0xf]
    %v473 = vld [vmem:[#allocation7 + $0x7c] sm:$0xf]
    %v506 = vunpack.c.l.b16 %v442
    %v507 = vunpack.c.l.b16 %v443
    %v508 = vunpack.c.l.b16 %v444
    %v509 = vunpack.c.l.b16 %v445
    %v510 = vunpack.c.l.b16 %v446
    %v511 = vunpack.c.l.b16 %v447
    %v512 = vunpack.c.l.b16 %v448
    %v513 = vunpack.c.l.b16 %v449
    %v514 = vunpack.c.l.b16 %v450
    %v515 = vunpack.c.l.b16 %v451
    %v516 = vunpack.c.l.b16 %v452
    %v517 = vunpack.c.l.b16 %v453
    %v518 = vunpack.c.l.b16 %v454
    %v519 = vunpack.c.l.b16 %v455
    %v520 = vunpack.c.l.b16 %v456
    %v521 = vunpack.c.l.b16 %v457
    %v522 = vunpack.c.l.b16 %v458
    %v523 = vunpack.c.l.b16 %v459
    %v524 = vunpack.c.l.b16 %v460
    %v525 = vunpack.c.l.b16 %v461
    %v526 = vunpack.c.l.b16 %v462
    %v527 = vunpack.c.l.b16 %v463
    %v528 = vunpack.c.l.b16 %v464
    %v529 = vunpack.c.l.b16 %v465
    %v530 = vunpack.c.l.b16 %v466
    %v531 = vunpack.c.l.b16 %v467
    %v532 = vunpack.c.l.b16 %v468
    %v533 = vunpack.c.l.b16 %v469
    %v534 = vunpack.c.l.b16 %v470
    %v535 = vunpack.c.l.b16 %v471
    %v536 = vunpack.c.l.b16 %v472
    %v537 = vunpack.c.l.b16 %v473
    %v538 = vpack.c.b16 %v507, %v506
    %v539 = vpack.c.b16 %v509, %v508
    %v540 = vpack.c.b16 %v511, %v510
    %v541 = vpack.c.b16 %v513, %v512
    %v542 = vpack.c.b16 %v515, %v514
    %v543 = vpack.c.b16 %v517, %v516
    %v544 = vpack.c.b16 %v519, %v518
    %v545 = vpack.c.b16 %v521, %v520
    %v546 = vpack.c.b16 %v523, %v522
    %v547 = vpack.c.b16 %v525, %v524
    %v548 = vpack.c.b16 %v527, %v526
    %v549 = vpack.c.b16 %v529, %v528
    %v550 = vpack.c.b16 %v531, %v530
    %v551 = vpack.c.b16 %v533, %v532
    %v552 = vpack.c.b16 %v535, %v534
    %v553 = vpack.c.b16 %v537, %v536
    %570 = vmatpush.bf16.msra.mxu0 %v545
    %571 = vmatpush.bf16.msra.mxu0 %v544
    %572 = vmatpush.bf16.msra.mxu0 %v543
    %573 = vmatpush.bf16.msra.mxu0 %v542
    %574 = vmatpush.bf16.msra.mxu0 %v541
    %575 = vmatpush.bf16.msra.mxu0 %v540
    %576 = vmatpush.bf16.msra.mxu0 %v539
    %577 = vmatpush.bf16.msra.mxu0 %v538
    %578 = vmatmul.bf16.gmra.mxu0 %v438
    %v579 = vpop.f32.mrf.mxu0
    %v580 = vadd.f32 0.0, %v579
    %v581 = vpop.f32.mrf.mxu0
    %v582 = vadd.f32 0.0, %v581
    %583 = vmatmul.bf16.gmra.mxu0 %v440
    %v584 = vpop.f32.mrf.mxu0
    %v585 = vadd.f32 0.0, %v584
    %v586 = vpop.f32.mrf.mxu0
    %v587 = vadd.f32 0.0, %v586
    %588 = vdwg.mxu0
    %589 = vmatpush.bf16.msra.mxu0 %v553
    %590 = vmatpush.bf16.msra.mxu0 %v552
    %591 = vmatpush.bf16.msra.mxu0 %v551
    %592 = vmatpush.bf16.msra.mxu0 %v550
    %593 = vmatpush.bf16.msra.mxu0 %v549
    %594 = vmatpush.bf16.msra.mxu0 %v548
    %595 = vmatpush.bf16.msra.mxu0 %v547
    %596 = vmatpush.bf16.msra.mxu0 %v546
    %597 = vmatmul.bf16.gmra.mxu0 %v439
    %v598 = vpop.f32.mrf.mxu0
    %v599 = vadd.f32 %v580, %v598
    %v600 = vpop.f32.mrf.mxu0
    %v601 = vadd.f32 %v582, %v600
    %602 = vmatmul.bf16.gmra.mxu0 %v441
    %v603 = vpop.f32.mrf.mxu0
    %v604 = vadd.f32 %v585, %v603
    %v605 = vpop.f32.mrf.mxu0
    %v606 = vadd.f32 %v587, %v605
    %607 = vdwg.mxu0
    %v608 = vadd.f32 %v70, %v599
    %v609 = vadd.f32 %v71, %v601
    %v610 = vadd.f32 %v72, %v604
    %v611 = vadd.f32 %v73, %v606
    %612 = vst [vmem:[#allocation8] sm:$0xff] %v608
    %613 = vst [vmem:[#allocation8 + $0x8] sm:$0xff] %v609
    %614 = vst [vmem:[#allocation8 + $0x10] sm:$0xff] %v610
    %615 = vst [vmem:[#allocation8 + $0x18] sm:$0xff] %v611
    // Predicated region
    $region30: #{tpu_custom_call.1} parent=1 // pred_check
      _
    $region31: #{tpu_custom_call.1} parent=1 // pred_check_branch
      %617 = sbr.rel (0) target = $region33
    $region32: #{tpu_custom_call.1} parent=1 // pred_region
      %619 = vsyncadd [#allocation4], 0
      %s620 = sshll.u32 [#allocation8], 4
      %s621 = int_to_ptr.vmem [resolvable:$true] %s620
      %s622 = sshll.u32 %s3, 4
      %s623 = int_to_ptr.hbm [resolvable:$true] %s622
      %628 = dma.vmem_to_hbm [thread:$0]  %s621, 512, %s623, [#allocation4], 128, 128, 8
    $region33: #{tpu_custom_call.1} parent=1 // pred_fallthru
      _
    // Predicated region
    $region34: #{tpu_custom_call.1} parent=1 // pred_check
      _
    $region35: #{tpu_custom_call.1} parent=1 // pred_check_branch
      %630 = sbr.rel (0) target = $region37
    $region36: #{tpu_custom_call.1} parent=1 // pred_region
      %632 = dma.done [#allocation4], 512
    $region37: #{tpu_custom_call.1} parent=1 // pred_fallthru
      _
    %633 = vsyncpa [#allocation3], 1
    %634 = vsyncpa [#allocation6], 1
    %635 = vsyncpa [#allocation4], 1

</llo_original>
